<compile_context>
chip_gen: v5e
topology: v5e:2x2
jax: 0.10.0
libtpu: 0.0.40
codegen_flags: <defaults>
</compile_context>

<pallas_src>
import math

import numpy as np
import jax
import jax.numpy as jnp
from jax.experimental import pallas as pl
from jax.experimental.pallas import tpu as pltpu


def _embed_pe_kernel(ids_ref, pe_ref, table_ref, o_ref):
    """One grid step == one (batch row, sequence tile).

    ids_ref:   (1, Ts, 1) int32   token ids, sequence laid out along sublanes
    pe_ref:    (Ts, E)            positional-embedding slice for this sequence tile
    table_ref: (V, E)             full embedding table, VMEM-resident (constant index_map)
    o_ref:     (1, Ts, E)         output tile (lane-dense, single unmasked store)
    """
    ids = ids_ref[0]                                      # (Ts, 1) int32
    Ts = ids.shape[0]
    V = table_ref.shape[0]

    # On-chip gather: one-hot (Ts, V) @ (V, E) on the otherwise-idle MXU.  Exact for 0/1
    # weights with f32 accumulation; out-of-range ids produce an all-zero row (no OOB DMA).
    one_hot = (ids == jax.lax.broadcasted_iota(jnp.int32, (Ts, V), 1)).astype(table_ref.dtype)
    rows = jnp.dot(one_hot, table_ref[...], preferred_element_type=jnp.float32)   # (Ts, E) f32

    # x = embed(inputs) + pe[:S]; reproject == Identity and dropout is an eval no-op.
    o_ref[0] = (rows + pe_ref[...].astype(jnp.float32)).astype(o_ref.dtype)
    # TODO(synk): the init_weight branch (pretrained embedding + nn.Linear reproject) would
    # add one more MXU matmul here; training-mode dropout would need pltpu.prng_seed /
    # pltpu.prng_random_bits.


def positional_embedding_table(d_model, max_len):
    """Replicates PositionalEmbedding.__init__ buffer `pe` (shape (max_len, d_model))."""
    pe = np.zeros((max_len, d_model), dtype=np.float32)
    position = np.arange(0, max_len, dtype=np.float32)[:, None]
    div_term = np.exp(
        np.arange(0, d_model, 2, dtype=np.float32) * -(math.log(10000.0) / d_model))
    pe[:, 0::2] = np.sin(position * div_term)
    pe[:, 1::2] = np.cos(position * div_term)
    return jnp.asarray(pe)


def _pick_seq_tile(S, sublane, max_tile):
    """Largest multiple of `sublane` that divides S and is <= max_tile."""
    best = sublane
    cand = sublane
    while cand <= min(S, max_tile):
        if S % cand == 0:
            best = cand
        cand += sublane
    return best


def input_position_embedding(inputs, embed_table, pe_table, *, max_seq_tile=512):
    """inputs: (B, S) int token ids. embed_table: (V, E). pe_table: (max_len>=S, E)."""
    B, S = inputs.shape
    V, E = embed_table.shape
    dtype = embed_table.dtype
    itemsize = jnp.dtype(dtype).itemsize
    sublane = 16 if itemsize == 2 else 8

    assert pe_table.shape[0] >= S and pe_table.shape[1] == E
    assert E % 128 == 0, "embed_dim must be lane-aligned (multiple of 128)"
    assert S % sublane == 0, f"seq_len must be a multiple of {sublane} for dtype {dtype}"
    # Small/medium-vocab path: the whole table stays VMEM-resident across the grid.
    assert V * E * itemsize <= 24 * 1024 * 1024, "vocab too large for the VMEM-resident path"
    # TODO(synk): for large vocab, fall back to an HBM row-gather with one shared DMA
    # semaphore, a dynamic pl.loop over (deduped) rows and cross-step double-buffering.

    Ts = _pick_seq_tile(S, sublane, max_seq_tile)

    pe = pe_table[:S].astype(dtype)                       # == self.pe[:, :x.size(1)]
    ids = inputs.astype(jnp.int32).reshape(B, S, 1)       # seq along sublanes inside the kernel

    # VMEM budget: resident table + double-buffered PE / ids / output tiles, with headroom.
    vmem_bytes = (V * E * itemsize
                  + 2 * Ts * E * itemsize                 # PE tile
                  + 2 * Ts * E * itemsize                 # output tile
                  + 2 * Ts * 128 * 4)                     # ids tile (lane-padded int32)
    vmem_limit = int(max(2 * vmem_bytes, 32 * 1024 * 1024))

    grid_spec = pltpu.PrefetchScalarGridSpec(
        num_scalar_prefetch=0,
        grid=(B, S // Ts),
        in_specs=[
            pl.BlockSpec((1, Ts, 1), lambda b, s: (b, s, 0)),    # token ids for this tile
            pl.BlockSpec((Ts, E), lambda b, s: (s, 0)),          # PE slice for this tile
            pl.BlockSpec((V, E), lambda b, s: (0, 0)),           # table: constant map -> resident
        ],
        out_specs=pl.BlockSpec((1, Ts, E), lambda b, s: (b, s, 0)),
    )

    return pl.pallas_call(
        _embed_pe_kernel,
        out_shape=jax.ShapeDtypeStruct((B, S, E), dtype),
        grid_spec=grid_spec,
        compiler_params=pltpu.CompilerParams(
            dimension_semantics=("parallel", "parallel"),
            vmem_limit_bytes=vmem_limit),
    )(ids, pe, embed_table)


def _reference(inputs, embed_table, pe_table):
    """Plain-JAX replica of the torch forward (default path, eval mode), in f32."""
    S = inputs.shape[1]
    return (embed_table.astype(jnp.float32)[inputs]
            + pe_table[:S].astype(jnp.float32)[None, :, :])


if __name__ == "__main__":
    # batch=2, seq_len=16, vocab_size=32, embed_dim=128
    B, S, V, E = 2, 16, 32, 128

    key = jax.random.PRNGKey(0)
    k_ids, k_tab = jax.random.split(key)
    inputs = jax.random.randint(k_ids, (B, S), 0, V, dtype=jnp.int32)
    # bf16 storage for tables/output (halves HBM traffic); the add runs in f32 in-vreg.
    embed_table = jax.random.normal(k_tab, (V, E), dtype=jnp.float32).astype(jnp.bfloat16)
    pe_table = positional_embedding_table(E, max_len=S).astype(jnp.bfloat16)

    out = input_position_embedding(inputs, embed_table, pe_table)
    out = jax.block_until_ready(out)

    ref = _reference(inputs, embed_table, pe_table)
    assert out.shape == (B, S, E)
    assert out.dtype == jnp.bfloat16
    assert jnp.allclose(out.astype(jnp.float32), ref, atol=1e-2, rtol=1e-2), "mismatch vs reference"

    print("KERNEL_OK")
</pallas_src>

<mosaic_0001>
module attributes {stable_mosaic.version = 11 : i64} {
  func.func @_embed_pe_kernel(%arg0: i32, %arg1: i32, %arg2: memref<1x16x1xi32, #tpu.memory_space<vmem>>, %arg3: memref<16x128xbf16, #tpu.memory_space<vmem>>, %arg4: memref<32x128xbf16, #tpu.memory_space<vmem>>, %arg5: memref<1x16x128xbf16, #tpu.memory_space<vmem>>) attributes {dimension_semantics = [#tpu.dimension_semantics<parallel>, #tpu.dimension_semantics<parallel>], iteration_bounds = array<i64: 2, 1>, scalar_prefetch = 0 : i64, scratch_operands = 0 : i64, tpu.core_type = #tpu.core_type<tc>, window_params = [{transform_indices = @transform_0, window_bounds = array<i64: 1, 16, 1>}, {transform_indices = @transform_1, window_bounds = array<i64: 16, 128>}, {pipeline_mode = #tpu.pipeline_mode<synchronous>, transform_indices = @transform_2, window_bounds = array<i64: 32, 128>}, {transform_indices = @transform_3, window_bounds = array<i64: 1, 16, 128>}]} {
    %c0 = arith.constant 0 : index
    %c0_0 = arith.constant 0 : index
    %c0_1 = arith.constant 0 : index
    %0 = vector.load %arg2[%c0, %c0_0, %c0_1] : memref<1x16x1xi32, #tpu.memory_space<vmem>>, vector<1x16x1xi32>
    %1 = vector.shape_cast %0 : vector<1x16x1xi32> to vector<16x1xi32>
    %2 = tpu.iota {dimensions = array<i32: 1>} : vector<16x32xi32>
    %3 = vector.broadcast %1 : vector<16x1xi32> to vector<16x32xi32>
    %4 = arith.cmpi eq, %3, %2 : vector<16x32xi32>
    %5 = arith.extui %4 : vector<16x32xi1> to vector<16x32xi32>
    %6 = arith.sitofp %5 : vector<16x32xi32> to vector<16x32xf32>
    %7 = arith.truncf %6 : vector<16x32xf32> to vector<16x32xbf16>
    %c0_2 = arith.constant 0 : index
    %c0_3 = arith.constant 0 : index
    %8 = vector.load %arg4[%c0_2, %c0_3] : memref<32x128xbf16, #tpu.memory_space<vmem>>, vector<32x128xbf16>
    %cst = arith.constant dense<0.000000e+00> : vector<16x128xf32>
    %9 = tpu.matmul %7, %8, %cst {dimension_numbers = #tpu.dot_dimension_numbers<[1], [0], [0], [1], [0, 0, 1, 1], [], []>} : vector<16x32xbf16>, vector<32x128xbf16>, vector<16x128xf32> -> vector<16x128xf32>
    %c0_4 = arith.constant 0 : index
    %c0_5 = arith.constant 0 : index
    %10 = vector.load %arg3[%c0_4, %c0_5] : memref<16x128xbf16, #tpu.memory_space<vmem>>, vector<16x128xbf16>
    %11 = arith.extf %10 : vector<16x128xbf16> to vector<16x128xf32>
    %12 = arith.addf %9, %11 : vector<16x128xf32>
    %13 = arith.truncf %12 : vector<16x128xf32> to vector<16x128xbf16>
    %c0_6 = arith.constant 0 : index
    %c0_7 = arith.constant 0 : index
    %c0_8 = arith.constant 0 : index
    %14 = vector.load %arg5[%c0_6, %c0_7, %c0_8] : memref<1x16x128xbf16, #tpu.memory_space<vmem>>, vector<1x16x128xbf16>
    %15 = vector.shape_cast %14 : vector<1x16x128xbf16> to vector<16x128xbf16>
    %16 = vector.shape_cast %13 : vector<16x128xbf16> to vector<1x16x128xbf16>
    tpu.vector_store %arg5[%c0_6, %c0_7, %c0_8], %16 {strides = array<i32>} : memref<1x16x128xbf16, #tpu.memory_space<vmem>>, vector<1x16x128xbf16>,
    return
  }
  func.func @transform_0(%arg0: i32, %arg1: i32) -> (i32, i32, i32) {
    %c0_i32 = arith.constant 0 : i32
    %c0_i32_0 = arith.constant 0 : i32
    return %arg0, %arg1, %c0_i32 : i32, i32, i32
  }
  func.func @transform_1(%arg0: i32, %arg1: i32) -> (i32, i32) {
    %c0_i32 = arith.constant 0 : i32
    %c0_i32_0 = arith.constant 0 : i32
    return %arg1, %c0_i32 : i32, i32
  }
  func.func @transform_2(%arg0: i32, %arg1: i32) -> (i32, i32) {
    %c0_i32 = arith.constant 0 : i32
    %c0_i32_0 = arith.constant 0 : i32
    %c0_i32_1 = arith.constant 0 : i32
    return %c0_i32, %c0_i32_0 : i32, i32
  }
  func.func @transform_3(%arg0: i32, %arg1: i32) -> (i32, i32, i32) {
    %c0_i32 = arith.constant 0 : i32
    %c0_i32_0 = arith.constant 0 : i32
    return %arg0, %arg1, %c0_i32 : i32, i32, i32
  }
}

</mosaic_0001>

<llo_original>
// kernel: tpu_custom_call.1
$region0: #{tpu_custom_call.1}
  #allocation0 [shape = 'u32[]', space=smem, size = 0x4, offset = 0x4, fixed_abs, tag = 'smem constant byte address 0x4 - core index']
  #allocation1 [shape = 'u32[72,128]{1,0:T(1,128)}', space=vmem, size = 0x9000, scoped, tag = 'internal scratch']
  %s0 = inlined_call_operand.vmem [shape: s32[2,16,1], index: 0, kind: input, shape index: {}]
  %s1 = inlined_call_operand.vmem [shape: bf16[16,128], index: 1, kind: input, shape index: {}]
  %s2 = inlined_call_operand.vmem [shape: bf16[32,128], index: 2, kind: input, shape index: {}]
  %s3 = inlined_call_operand.hbm [shape: bf16[2,16,128], index: 3, kind: output, shape index: {}]
  %s4 = sld [smem:[#allocation0]]
  $region45: #{tpu_custom_call.1} parent=0
    _
  %s6 = ssub.s32 1, %s4
  %s7 = scalar_select 0, %s6, %s4
  $region1: #{tpu_custom_call.1} parent=0
    #allocation2 [shape = 'u8[8192]{0}', space=vmem, size = 0x2000, scoped, tag = 'output window, operand 0']
    #allocation3 [shape = 's32[2]{0}', space=sflag, size = 0x8, scoped, tag = 'scoped memory for tpu_custom_call.1']
    %8 = vsyncpa [#allocation3], 0
    %s9 = scalar_lea.sflag [#allocation3], 1
    %10 = vsyncpa %s9, 0
    loop: start=0, step=1, limit=4
    $region2: #{tpu_custom_call.1} parent=1 // loop_pre_header
      _
    $region3: #{tpu_custom_call.1} parent=1 // loop_header
      %s12 = sphi 0, %s16
      %p13 = scmp.ge.s32.totalorder %s12, 4
      %s19 = sphi 0, %s31
      %s20 = sphi 0, %s27
      %s21 = sphi 0, %s19
      %s22 = sphi 0, %s20
      %s23 = sphi 0, %s21
      %s24 = sphi 0, %s22
      %s36 = sphi 0, %s38
      %s39 = sphi 0, %s36
      %s40 = sphi 0, %s39
      %s56 = sphi 0, %s40
      %s62 = sphi 0, %s64
      %s65 = sphi 0, %s62
      %s66 = sphi 0, %s65
      %s82 = sphi 0, %s66
      %s86 = sphi 0, %s86
      %s88 = sphi 0, %s86
      %s89 = sphi 0, %s88
      %s103 = sphi 0, %s89
      %s111 = sphi 0, %s113
      %s114 = sphi 0, %s111
      %s115 = sphi 0, %s114
      %s131 = sphi 0, %s115
    $region4: #{tpu_custom_call.1} parent=1 // loop_header_branch
      %15 = sbr.rel (%p13) target = $region8
    $region5: #{tpu_custom_call.1} parent=1 // loop_body
      %s17 = ssub.s32 %s12, 1
      %s18 = ssub.s32 %s12, 2
      %s25 = sadd.s32 1, %s20
      %p26 = scmp.ge.s32.totalorder %s25, 1
      %s27 = scalar_select %p26, 0, %s25
      %s28 = sadd.s32 1, %s19
      %s29 = scalar_select %p26, %s28, %s19
      %p30 = scmp.ge.s32.totalorder %s29, 2
      %s31 = scalar_select %p30, 0, %s29
      %s32 = ssub.s32 %s19, %s31
      %s33 = ssub.s32 %s20, %s27
      %s34 = sor.u32 %s32, %s33
      %p35 = scmp.eq.s32.totalorder %s34, 0
      %s37 = sadd.s32 %s36, 1
      %s38 = scalar_select %p35, %s36, %s37
      %p41 = pneg %p35
      %p42 = scmp.eq.s32.totalorder %s12, 1
      %p43 = por %p41, %p42
      %p44 = scmp.ne.s32.totalorder %s36, %s39
      %p45 = scmp.eq.s32.totalorder %s12, 0
      %p46 = por %p44, %p45
      %p47 = scmp.ne.s32.totalorder %s36, %s39
      %p48 = scmp.eq.s32.totalorder %s17, 1
      %p49 = por %p47, %p48
      %p50 = scmp.ne.s32.totalorder %s39, %s40
      %p51 = scmp.eq.s32.totalorder %s17, 0
      %p52 = por %p50, %p51
      %p53 = scmp.ne.s32.totalorder %s39, %s40
      %p54 = scmp.eq.s32.totalorder %s18, 1
      %p55 = por %p53, %p54
      %p57 = scmp.ne.s32.totalorder %s40, %s56
      %p58 = scmp.eq.s32.totalorder %s18, 0
      %p59 = por %p57, %p58
      %s60 = ssub.s32 %s20, %s27
      %p61 = scmp.eq.s32.totalorder %s60, 0
      %s63 = sadd.s32 %s62, 1
      %s64 = scalar_select %p61, %s62, %s63
      %p67 = pneg %p61
      %p68 = scmp.eq.s32.totalorder %s12, 1
      %p69 = por %p67, %p68
      %p70 = scmp.ne.s32.totalorder %s62, %s65
      %p71 = scmp.eq.s32.totalorder %s12, 0
      %p72 = por %p70, %p71
      %p73 = scmp.ne.s32.totalorder %s62, %s65
      %p74 = scmp.eq.s32.totalorder %s17, 1
      %p75 = por %p73, %p74
      %p76 = scmp.ne.s32.totalorder %s65, %s66
      %p77 = scmp.eq.s32.totalorder %s17, 0
      %p78 = por %p76, %p77
      %p79 = scmp.ne.s32.totalorder %s65, %s66
      %p80 = scmp.eq.s32.totalorder %s18, 1
      %p81 = por %p79, %p80
      %p83 = scmp.ne.s32.totalorder %s66, %s82
      %p84 = scmp.eq.s32.totalorder %s18, 0
      %p85 = por %p83, %p84
      %s87 = sadd.s32 %s86, 1
      %p90 = scmp.eq.s32.totalorder %s12, 1
      %p91 = scmp.ne.s32.totalorder %s86, %s88
      %p92 = scmp.eq.s32.totalorder %s12, 0
      %p93 = por %p91, %p92
      %p94 = scmp.ne.s32.totalorder %s86, %s88
      %p95 = scmp.eq.s32.totalorder %s17, 1
      %p96 = por %p94, %p95
      %p97 = scmp.ne.s32.totalorder %s88, %s89
      %p98 = scmp.eq.s32.totalorder %s17, 0
      %p99 = por %p97, %p98
      %p100 = scmp.ne.s32.totalorder %s88, %s89
      %p101 = scmp.eq.s32.totalorder %s18, 1
      %p102 = por %p100, %p101
      %p104 = scmp.ne.s32.totalorder %s89, %s103
      %p105 = scmp.eq.s32.totalorder %s18, 0
      %p106 = por %p104, %p105
      %s107 = ssub.s32 %s19, %s31
      %s108 = ssub.s32 %s20, %s27
      %s109 = sor.u32 %s107, %s108
      %p110 = scmp.eq.s32.totalorder %s109, 0
      %s112 = sadd.s32 %s111, 1
      %s113 = scalar_select %p110, %s111, %s112
      %p116 = pneg %p110
      %p117 = scmp.eq.s32.totalorder %s12, 1
      %p118 = por %p116, %p117
      %p119 = scmp.ne.s32.totalorder %s111, %s114
      %p120 = scmp.eq.s32.totalorder %s12, 0
      %p121 = por %p119, %p120
      %p122 = scmp.ne.s32.totalorder %s111, %s114
      %p123 = scmp.eq.s32.totalorder %s17, 1
      %p124 = por %p122, %p123
      %p125 = scmp.ne.s32.totalorder %s114, %s115
      %p126 = scmp.eq.s32.totalorder %s17, 0
      %p127 = por %p125, %p126
      %p128 = scmp.ne.s32.totalorder %s114, %s115
      %p129 = scmp.eq.s32.totalorder %s18, 1
      %p130 = por %p128, %p129
      %p132 = scmp.ne.s32.totalorder %s115, %s131
      %p133 = scmp.eq.s32.totalorder %s18, 0
      %p134 = por %p132, %p133
      %p135 = scmp.le.s32.totalorder 1, %s12
      %p136 = scmp.lt.s32.totalorder %s12, 3
      %p137 = pnand %p135, %p136
      %p138 = pneg %p137
      // Predicated region
      $region9: #{tpu_custom_call.1} parent=5 // pred_check
        _
      $region10: #{tpu_custom_call.1} parent=5 // pred_check_branch
        %140 = sbr.rel (%p137) target = $region12
      $region11: #{tpu_custom_call.1} parent=5 // pred_region
        %s141 = ssub.s32 %s12, 1
        // Predicated region
        $region13: #{tpu_custom_call.1} parent=11 // pred_check
          %p142 = pneg %p78
        $region14: #{tpu_custom_call.1} parent=11 // pred_check_branch
          %144 = sbr.rel (%p142) target = $region16
        $region15: #{tpu_custom_call.1} parent=11 // pred_region
          %s145 = smul.u32 2, %s22
          %p146 = scmp.lt.s32.totalorder %s145, 1
          %s147 = scalar_select %p146, %s145, 1
          %s148 = smul.addr %s147, 4
          %s149 = scalar_lea.vmem %s1, %s148
          %s150 = smul.u32 2, %s22
        $region16: #{tpu_custom_call.1} parent=11 // pred_fallthru
          _
        // Predicated region
        $region17: #{tpu_custom_call.1} parent=11 // pred_check
          %p151 = pneg %p99
        $region18: #{tpu_custom_call.1} parent=11 // pred_check_branch
          %153 = sbr.rel (%p151) target = $region20
        $region19: #{tpu_custom_call.1} parent=11 // pred_region
          _
        $region20: #{tpu_custom_call.1} parent=11 // pred_fallthru
          _
      $region12: #{tpu_custom_call.1} parent=5 // pred_fallthru
        _
      %p154 = scmp.lt.s32.totalorder %s12, 2
      // Predicated region
      $region21: #{tpu_custom_call.1} parent=5 // pred_check
        %p155 = pneg %p154
      $region22: #{tpu_custom_call.1} parent=5 // pred_check_branch
        %157 = sbr.rel (%p155) target = $region24
      $region23: #{tpu_custom_call.1} parent=5 // pred_region
        // Predicated region
        $region25: #{tpu_custom_call.1} parent=23 // pred_check
          %p158 = pneg %p46
        $region26: #{tpu_custom_call.1} parent=23 // pred_check_branch
          %160 = sbr.rel (%p158) target = $region28
        $region27: #{tpu_custom_call.1} parent=23 // pred_region
          %s161 = smul.u32 2, %s20
          %p162 = scmp.lt.s32.totalorder %s19, 1
          %s163 = scalar_select %p162, %s19, 1
          %p164 = scmp.lt.s32.totalorder %s161, 1
          %s165 = scalar_select %p164, %s161, 1
          %s166 = smul.addr %s163, 2
          %s167 = sadd.s32 %s165, %s166
          %s168 = smul.addr %s167, 8
          %s169 = scalar_lea.vmem %s0, %s168
          %s170 = smul.u32 2, %s20
        $region28: #{tpu_custom_call.1} parent=23 // pred_fallthru
          _
      $region24: #{tpu_custom_call.1} parent=5 // pred_fallthru
        _
      %p171 = scmp.le.s32.totalorder 1, %s12
      %p172 = scmp.lt.s32.totalorder %s12, 3
      %p173 = pnand %p171, %p172
      %p174 = pneg %p173
      // Predicated region
      $region29: #{tpu_custom_call.1} parent=5 // pred_check
        _
      $region30: #{tpu_custom_call.1} parent=5 // pred_check_branch
        %176 = sbr.rel (%p173) target = $region32
      $region31: #{tpu_custom_call.1} parent=5 // pred_region
        %s177 = ssub.s32 %s12, 1
        %s178 = smul.u32 2, %s22
        %p179 = scmp.lt.s32.totalorder %s21, 1
        %s180 = scalar_select %p179, %s21, 1
        %p181 = scmp.lt.s32.totalorder %s178, 1
        %s182 = scalar_select %p181, %s178, 1
        %s183 = smul.addr %s180, 2
        %s184 = sadd.s32 %s182, %s183
        %s185 = smul.addr %s184, 8
        %s186 = scalar_lea.vmem %s0, %s185
        %p187 = pneg %p52
        %p188 = pneg %p49
        %s189 = smul.u32 2, %s22
        %p190 = scmp.lt.s32.totalorder %s189, 1
        %s191 = scalar_select %p190, %s189, 1
        %s192 = smul.addr %s191, 4
        %s193 = scalar_lea.vmem %s1, %s192
        %p194 = pneg %p78
        %p195 = pneg %p75
        %p196 = pneg %p99
        %p197 = pneg %p96
        %p198 = pneg %p127
        %p199 = pneg %p124
        %s200 = sand.u32 %s114, 1
        %s201 = scalar_lea.sflag [#allocation3], %s200
        %s202 = sand.u32 %s114, 1
        %s203 = smul.addr %s202, 8
        %s204 = scalar_lea.vmem [#allocation2], %s203
        %s205 = smul.u32 2, %s22
        %p206 = scmp.lt.s32.totalorder %s21, 1
        %s207 = scalar_select %p206, %s21, 1
        %p208 = scmp.lt.s32.totalorder %s205, 1
        %s209 = scalar_select %p208, %s205, 1
        %s210 = smul.addr %s207, 2
        %s211 = sadd.s32 %s209, %s210
        %s212 = smul.addr %s211, 8
        %s213 = scalar_lea.vmem %s0, %s212
        %s214 = smul.u32 2, %s22
        %s215 = smul.u32 2, %s22
        %p216 = scmp.lt.s32.totalorder %s215, 1
        %s217 = scalar_select %p216, %s215, 1
        %s218 = smul.addr %s217, 4
        %s219 = scalar_lea.vmem %s1, %s218
        %s220 = smul.u32 2, %s22
        %s221 = smul.u32 2, %s22
        %v223 = vld [vmem:[%s213] sm:$0xff]
        %v224 = vld [vmem:[%s213 + $0x8] sm:$0xff]
        %v225 = vlaneseq
        %v226 = vand.u32 %v225, 127
        %227 = vset.pattern.permute.xlu0 0
        %228 = vperm.xlu0 %227, %v223
        %v229 = vpop.permute.xlu0 %228
        %230 = vset.pattern.permute.xlu0 0
        %231 = vperm.xlu0 %230, %v224
        %v232 = vpop.permute.xlu0 %231
        %vm233 = vcmp.eq.s32.totalorder %v229, %v226
        %vm234 = vcmp.eq.s32.totalorder %v232, %v226
        %v235 = vsel %vm233, 1, 0
        %v236 = vsel %vm234, 1, 0
        %v237 = vcvt.s32.f32 %v235
        %v238 = vcvt.s32.f32 %v236
        %v239 = vpack.c.bf16 %v238, %v237
        %v240 = vld [vmem:[%s2] sm:$0xf]
        %v241 = vld [vmem:[%s2 + $0x4] sm:$0xf]
        %v242 = vld [vmem:[%s2 + $0x8] sm:$0xf]
        %v243 = vld [vmem:[%s2 + $0xc] sm:$0xf]
        %v244 = vld [vmem:[%s219] sm:$0xf]
        %v245 = vld [vmem:[%s219 + $0x4] sm:$0xf]
        %v246 = vunpack.c.l.bf16 %v244
        %v247 = vunpack.c.l.bf16 %v245
        %v252 = vunpack.c.l.b16 %v240
        %v253 = vunpack.c.l.b16 %v241
        %v254 = vunpack.c.l.b16 %v242
        %v255 = vunpack.c.l.b16 %v243
        %v256 = vpack.c.b16 %v253, %v252
        %v257 = vpack.c.b16 %v255, %v254
        %vm260 = vcmask 261120
        %v262 = vsel %vm260, %v239, 0
        %264 = vmatpush.bf16.msra.mxu0 0
        %265 = vmatpush.bf16.msra.mxu0 0
        %266 = vmatpush.bf16.msra.mxu0 0
        %267 = vmatpush.bf16.msra.mxu0 0
        %268 = vmatpush.bf16.msra.mxu0 0
        %269 = vmatpush.bf16.msra.mxu0 0
        %270 = vmatpush.bf16.msra.mxu0 %v257
        %271 = vmatpush.bf16.msra.mxu0 %v256
        %272 = vmatmul.bf16.gmra.mxu0 %v262
        %v273 = vpop.f32.mrf.mxu0
        %v274 = vadd.f32 %v246, %v273
        %v275 = vpop.f32.mrf.mxu0
        %v276 = vadd.f32 %v247, %v275
        %277 = vdwg.mxu0
        %v278 = vpack.c.bf16 %v274, %v274
        %v279 = vpack.c.bf16 %v276, %v276
        %280 = vst [vmem:[%s204] sm:$0xf] %v278
        %281 = vst [vmem:[%s204 + $0x4] sm:$0xf] %v279
        %s282 = sand.u32 %s114, 1
        %s283 = scalar_lea.sflag [#allocation3], %s282
        %s284 = sand.u32 %s114, 1
        %s285 = smul.addr %s284, 8
        %s286 = scalar_lea.vmem [#allocation2], %s285
        // Predicated region
        $region33: #{tpu_custom_call.1} parent=31 // pred_check
          %p287 = pneg %p124
        $region34: #{tpu_custom_call.1} parent=31 // pred_check_branch
          %289 = sbr.rel (%p287) target = $region36
        $region35: #{tpu_custom_call.1} parent=31 // pred_region
          %s290 = smul.u32 2, %s22
          %292 = vsyncadd %s283, 0
          %s293 = smul.addr %s21, 2
          %s294 = sadd.s32 %s290, %s293
          %s295 = smul.addr %s294, 4
          %s296 = scalar_lea.hbm %s3, %s295
          %s297 = sshll.u32 %s286, 4
          %s298 = int_to_ptr.vmem [resolvable:$true] %s297
          %s299 = sshll.u32 %s296, 4
          %s300 = int_to_ptr.hbm [resolvable:$true] %s299
          %305 = dma.vmem_to_hbm [thread:$0]  %s298, 128, %s300, %s283, 64, 64, 4
        $region36: #{tpu_custom_call.1} parent=31 // pred_fallthru
          _
      $region32: #{tpu_custom_call.1} parent=5 // pred_fallthru
        _
      %p306 = scmp.le.s32.totalorder 2, %s12
      // Predicated region
      $region37: #{tpu_custom_call.1} parent=5 // pred_check
        %p307 = pneg %p306
      $region38: #{tpu_custom_call.1} parent=5 // pred_check_branch
        %309 = sbr.rel (%p307) target = $region40
      $region39: #{tpu_custom_call.1} parent=5 // pred_region
        %s310 = ssub.s32 %s12, 2
        // Predicated region
        $region41: #{tpu_custom_call.1} parent=39 // pred_check
          %p311 = pneg %p130
        $region42: #{tpu_custom_call.1} parent=39 // pred_check_branch
          %313 = sbr.rel (%p311) target = $region44
        $region43: #{tpu_custom_call.1} parent=39 // pred_region
          %s314 = sand.u32 %s115, 1
          %s315 = scalar_lea.sflag [#allocation3], %s314
          %s316 = sand.u32 %s115, 1
          %s317 = smul.addr %s316, 8
          %s318 = scalar_lea.vmem [#allocation2], %s317
          %320 = dma.done %s315, 128
        $region44: #{tpu_custom_call.1} parent=39 // pred_fallthru
          _
      $region40: #{tpu_custom_call.1} parent=5 // pred_fallthru
        _
    $region6: #{tpu_custom_call.1} parent=1 // loop_footer
      %s16 = sadd.s32 1, %s12
    $region7: #{tpu_custom_call.1} parent=1 // loop_footer_branch
      %11 = sbr.rel target = $region3
    $region8: #{tpu_custom_call.1} parent=1 // loop_exit
      _
    %321 = vsyncpa [#allocation3], 1
    %s322 = scalar_lea.sflag [#allocation3], 1
    %323 = vsyncpa %s322, 1

</llo_original>
